<compile_context>
chip_gen: v7x
topology: tpu7x:2x2x1
jax: 0.10.0
libtpu: 0.0.40
codegen_flags: <defaults>
</compile_context>

<pallas_src>
import jax
import jax.numpy as jnp
from jax.experimental import pallas as pl
from jax.experimental.pallas import tpu as pltpu


def _lstm_fc_kernel(x_ref, wih_ref, whh_ref, b_ref, wfc_ref, bfc_ref, out_ref):
    """Full LSTM recurrence + final FC, everything resident in VMEM.

    x_ref   : (B, T, I)  batch-first input (as given by the caller)
    wih_ref : (I, 4H)    W_ih^T, g-gate columns pre-scaled by 2, f32
    whh_ref : (H, 4H)    W_hh^T, g-gate columns pre-scaled by 2, bf16
    b_ref   : (1, 4H)    b_ih + b_hh, g-gate segment pre-scaled by 2, f32
    wfc_ref : (O, H)     fc.weight, f32
    bfc_ref : (1, O)     fc.bias, f32
    out_ref : (B, O)
    """
    B, T, I = x_ref.shape
    H = whh_ref.shape[0]
    O = wfc_ref.shape[0]

    x = x_ref[...]          # (B, T, I) — tiny, fully VMEM/vreg resident
    wih = wih_ref[...]      # (I, 4H) f32
    whh = whh_ref[...]      # (H, 4H) bf16 (native MXU input dtype)
    b = b_ref[...]          # (1, 4H) f32

    def input_proj(t):
        x_t = x[:, t, :]                                        # (B, I) static
        if I == 1:
            # VPU broadcast multiply; avoids a degenerate K=1 MXU matmul.
            return x_t * wih + b                                # (B, 4H)
        return jnp.dot(x_t, wih, preferred_element_type=jnp.float32) + b

    def gate_combine(gates, c):
        # Single full-width sigmoid per step (one EUP pass).  The g-gate
        # pre-activations were pre-scaled by 2, so tanh(z) = 2*sigmoid(2z) - 1
        # is recovered with VPU ops only.  Gate order is PyTorch's [i, f, g, o].
        sg = jax.nn.sigmoid(gates)                              # (B, 4H)
        i_g = sg[:, 0 * H:1 * H]
        f_g = sg[:, 1 * H:2 * H]
        g_g = 2.0 * sg[:, 2 * H:3 * H] - 1.0
        o_g = sg[:, 3 * H:4 * H]
        c = f_g * c + i_g * g_g
        h = o_g * jnp.tanh(c)                                   # 2nd EUP pass
        return h, c

    # ---- t = 0 peeled: h == 0, so no recurrent matmul needed. --------------
    h, c = gate_combine(input_proj(0), jnp.zeros((B, H), jnp.float32))

    # ---- Recurrence, fully unrolled (T is a static Python int). ------------
    for t in range(1, T):
        gates = input_proj(t) + jnp.dot(
            h.astype(jnp.bfloat16), whh, preferred_element_type=jnp.float32)
        h, c = gate_combine(gates, c)

    # ---- Final Linear on the last hidden state. -----------------------------
    if O == 1:
        # VPU multiply + lane reduction instead of an N=1 MXU matmul.
        out = jnp.sum(h * wfc_ref[...], axis=-1, keepdims=True) + bfc_ref[...]
    else:
        out = jnp.dot(h, wfc_ref[...].T,
                      preferred_element_type=jnp.float32) + bfc_ref[...]
    out_ref[...] = out.astype(out_ref.dtype)


def prepare_params(params):
    """One-time parameter preprocessing (hoisted out of the per-call path).

    - transposes W_ih / W_hh, sums the two biases
    - pre-scales the g-gate ([2H:3H]) columns/segment by 2 (tanh-via-sigmoid)
    - casts W_hh^T to bf16 for the recurrent MXU matmul (exact for the x2 scale)
    """
    H = params["w_hh"].shape[1]
    O = params["w_fc"].shape[0]
    gate_scale = jnp.ones((4 * H,), jnp.float32).at[2 * H:3 * H].set(2.0)

    wih_t = params["w_ih"].astype(jnp.float32).T * gate_scale[None, :]   # (I,4H)
    whh_t = (params["w_hh"].astype(jnp.float32).T
             * gate_scale[None, :]).astype(jnp.bfloat16)                 # (H,4H)
    b_all = ((params["b_ih"] + params["b_hh"]).astype(jnp.float32)
             * gate_scale).reshape(1, 4 * H)                             # (1,4H)
    wfc = params["w_fc"].astype(jnp.float32)                             # (O,H)
    bfc = params["b_fc"].astype(jnp.float32).reshape(1, O)               # (1,O)
    return {"wih_t": wih_t, "whh_t": whh_t, "b": b_all, "wfc": wfc, "bfc": bfc}


def lstm_model_forward(x, prepped):
    """x: (B, T, I) float32 (batch_first, like PyTorch). Returns (B, O)."""
    B, T, I = x.shape
    O = prepped["wfc"].shape[0]

    vmem_spec = pl.BlockSpec(memory_space=pltpu.MemorySpace.VMEM)
    return pl.pallas_call(
        _lstm_fc_kernel,
        out_shape=jax.ShapeDtypeStruct((B, O), jnp.float32),
        in_specs=[vmem_spec] * 6,
        out_specs=vmem_spec,
        compiler_params=pltpu.CompilerParams(
            vmem_limit_bytes=32 * 1024 * 1024),
    )(x, prepped["wih_t"], prepped["whh_t"], prepped["b"],
      prepped["wfc"], prepped["bfc"])


def _reference_forward(x, params):
    """Pure-JAX f32 reference of the PyTorch LSTMModel forward."""
    B, T, I = x.shape
    H = params["w_hh"].shape[1]
    w_ih, w_hh = params["w_ih"], params["w_hh"]
    b = params["b_ih"] + params["b_hh"]
    h = jnp.zeros((B, H), jnp.float32)
    c = jnp.zeros((B, H), jnp.float32)
    for t in range(T):
        gates = x[:, t, :] @ w_ih.T + h @ w_hh.T + b
        i_g = jax.nn.sigmoid(gates[:, 0 * H:1 * H])
        f_g = jax.nn.sigmoid(gates[:, 1 * H:2 * H])
        g_g = jnp.tanh(gates[:, 2 * H:3 * H])
        o_g = jax.nn.sigmoid(gates[:, 3 * H:4 * H])
        c = f_g * c + i_g * g_g
        h = o_g * jnp.tanh(c)
    return h @ params["w_fc"].T + params["b_fc"]


def init_params(key, input_size=1, hidden=32, output_size=1):
    """Deterministic uniform(-1/sqrt(H), 1/sqrt(H)) init, like nn.LSTM/Linear."""
    ks = jax.random.split(key, 6)
    bound = 1.0 / jnp.sqrt(jnp.float32(hidden))
    u = lambda k, shape: jax.random.uniform(
        k, shape, jnp.float32, minval=-bound, maxval=bound)
    return {
        "w_ih": u(ks[0], (4 * hidden, input_size)),
        "w_hh": u(ks[1], (4 * hidden, hidden)),
        "b_ih": u(ks[2], (4 * hidden,)),
        "b_hh": u(ks[3], (4 * hidden,)),
        "w_fc": u(ks[4], (output_size, hidden)),
        "b_fc": u(ks[5], (output_size,)),
    }


if __name__ == "__main__":
    key = jax.random.PRNGKey(0)
    k_x, k_p = jax.random.split(key)

    B, T, I, H, O = 2, 8, 1, 32, 1
    x = jax.random.normal(k_x, (B, T, I), dtype=jnp.float32)
    params = init_params(k_p, input_size=I, hidden=H, output_size=O)

    prepped = prepare_params(params)                 # one-time prep
    fwd = jax.jit(lstm_model_forward)                # per-call: kernel only

    out = jax.block_until_ready(fwd(x, prepped))

    ref = _reference_forward(x, params)
    assert out.shape == (B, O)
    # Tolerance loosened slightly vs. the pure-f32 version because the
    # recurrent matmul now uses bf16 MXU inputs (f32 accumulation).
    assert jnp.allclose(out, ref, atol=2e-3, rtol=1e-3), (out, ref)

    print("KERNEL_OK")
</pallas_src>

<mosaic_0001>
module attributes {stable_mosaic.version = 11 : i64} {
  func.func @_lstm_fc_kernel(%arg0: memref<2x8x1xf32, #tpu.memory_space<vmem>>, %arg1: memref<1x128xf32, #tpu.memory_space<vmem>>, %arg2: memref<32x128xbf16, #tpu.memory_space<vmem>>, %arg3: memref<1x128xf32, #tpu.memory_space<vmem>>, %arg4: memref<1x32xf32, #tpu.memory_space<vmem>>, %arg5: memref<1x1xf32, #tpu.memory_space<vmem>>, %arg6: memref<2x1xf32, #tpu.memory_space<vmem>>) attributes {dimension_semantics = [], scalar_prefetch = 0 : i64, scratch_operands = 0 : i64, tpu.core_type = #tpu.core_type<tc>} {
    %c0 = arith.constant 0 : index
    %c0_0 = arith.constant 0 : index
    %c0_1 = arith.constant 0 : index
    %0 = vector.load %arg0[%c0, %c0_0, %c0_1] : memref<2x8x1xf32, #tpu.memory_space<vmem>>, vector<2x8x1xf32>
    %c0_2 = arith.constant 0 : index
    %c0_3 = arith.constant 0 : index
    %1 = vector.load %arg1[%c0_2, %c0_3] : memref<1x128xf32, #tpu.memory_space<vmem>>, vector<1x128xf32>
    %c0_4 = arith.constant 0 : index
    %c0_5 = arith.constant 0 : index
    %2 = vector.load %arg2[%c0_4, %c0_5] : memref<32x128xbf16, #tpu.memory_space<vmem>>, vector<32x128xbf16>
    %c0_6 = arith.constant 0 : index
    %c0_7 = arith.constant 0 : index
    %3 = vector.load %arg3[%c0_6, %c0_7] : memref<1x128xf32, #tpu.memory_space<vmem>>, vector<1x128xf32>
    %4 = vector.extract_strided_slice %0 {offsets = [0, 0, 0], sizes = [2, 1, 1], strides = [1, 1, 1]} : vector<2x8x1xf32> to vector<2x1x1xf32>
    %5 = vector.shape_cast %4 : vector<2x1x1xf32> to vector<2x1xf32>
    %6 = vector.broadcast %5 : vector<2x1xf32> to vector<2x128xf32>
    %7 = vector.broadcast %1 : vector<1x128xf32> to vector<2x128xf32>
    %8 = arith.mulf %6, %7 : vector<2x128xf32>
    %9 = vector.broadcast %3 : vector<1x128xf32> to vector<2x128xf32>
    %10 = arith.addf %8, %9 : vector<2x128xf32>
    %cst = arith.constant 0.000000e+00 : f32
    %11 = vector.broadcast %cst : f32 to vector<2x32xf32>
    %12 = arith.negf %10 : vector<2x128xf32>
    %13 = math.exp %12 : vector<2x128xf32>
    %cst_8 = arith.constant 1.000000e+00 : f32
    %14 = vector.broadcast %cst_8 : f32 to vector<2x128xf32>
    %15 = arith.addf %14, %13 : vector<2x128xf32>
    %16 = arith.divf %14, %15 : vector<2x128xf32>
    %17 = vector.extract_strided_slice %16 {offsets = [0, 0], sizes = [2, 32], strides = [1, 1]} : vector<2x128xf32> to vector<2x32xf32>
    %18 = vector.extract_strided_slice %16 {offsets = [0, 32], sizes = [2, 32], strides = [1, 1]} : vector<2x128xf32> to vector<2x32xf32>
    %19 = vector.extract_strided_slice %16 {offsets = [0, 64], sizes = [2, 32], strides = [1, 1]} : vector<2x128xf32> to vector<2x32xf32>
    %cst_9 = arith.constant 2.000000e+00 : f32
    %20 = vector.broadcast %cst_9 : f32 to vector<2x32xf32>
    %21 = arith.mulf %20, %19 : vector<2x32xf32>
    %cst_10 = arith.constant 1.000000e+00 : f32
    %22 = vector.broadcast %cst_10 : f32 to vector<2x32xf32>
    %23 = arith.subf %21, %22 : vector<2x32xf32>
    %24 = vector.extract_strided_slice %16 {offsets = [0, 96], sizes = [2, 32], strides = [1, 1]} : vector<2x128xf32> to vector<2x32xf32>
    %25 = arith.mulf %18, %11 : vector<2x32xf32>
    %26 = arith.mulf %17, %23 : vector<2x32xf32>
    %27 = arith.addf %25, %26 : vector<2x32xf32>
    %28 = math.tanh %27 : vector<2x32xf32>
    %29 = arith.mulf %24, %28 : vector<2x32xf32>
    %30 = vector.extract_strided_slice %0 {offsets = [0, 1, 0], sizes = [2, 1, 1], strides = [1, 1, 1]} : vector<2x8x1xf32> to vector<2x1x1xf32>
    %31 = vector.shape_cast %30 : vector<2x1x1xf32> to vector<2x1xf32>
    %32 = vector.broadcast %31 : vector<2x1xf32> to vector<2x128xf32>
    %33 = vector.broadcast %1 : vector<1x128xf32> to vector<2x128xf32>
    %34 = arith.mulf %32, %33 : vector<2x128xf32>
    %35 = vector.broadcast %3 : vector<1x128xf32> to vector<2x128xf32>
    %36 = arith.addf %34, %35 : vector<2x128xf32>
    %37 = arith.truncf %29 : vector<2x32xf32> to vector<2x32xbf16>
    %cst_11 = arith.constant dense<0.000000e+00> : vector<2x128xf32>
    %38 = tpu.matmul %37, %2, %cst_11 {dimension_numbers = #tpu.dot_dimension_numbers<[1], [0], [0], [1], [0, 0, 1, 1], [], []>} : vector<2x32xbf16>, vector<32x128xbf16>, vector<2x128xf32> -> vector<2x128xf32>
    %39 = arith.addf %36, %38 : vector<2x128xf32>
    %40 = arith.negf %39 : vector<2x128xf32>
    %41 = math.exp %40 : vector<2x128xf32>
    %cst_12 = arith.constant 1.000000e+00 : f32
    %42 = vector.broadcast %cst_12 : f32 to vector<2x128xf32>
    %43 = arith.addf %42, %41 : vector<2x128xf32>
    %44 = arith.divf %42, %43 : vector<2x128xf32>
    %45 = vector.extract_strided_slice %44 {offsets = [0, 0], sizes = [2, 32], strides = [1, 1]} : vector<2x128xf32> to vector<2x32xf32>
    %46 = vector.extract_strided_slice %44 {offsets = [0, 32], sizes = [2, 32], strides = [1, 1]} : vector<2x128xf32> to vector<2x32xf32>
    %47 = vector.extract_strided_slice %44 {offsets = [0, 64], sizes = [2, 32], strides = [1, 1]} : vector<2x128xf32> to vector<2x32xf32>
    %cst_13 = arith.constant 2.000000e+00 : f32
    %48 = vector.broadcast %cst_13 : f32 to vector<2x32xf32>
    %49 = arith.mulf %48, %47 : vector<2x32xf32>
    %cst_14 = arith.constant 1.000000e+00 : f32
    %50 = vector.broadcast %cst_14 : f32 to vector<2x32xf32>
    %51 = arith.subf %49, %50 : vector<2x32xf32>
    %52 = vector.extract_strided_slice %44 {offsets = [0, 96], sizes = [2, 32], strides = [1, 1]} : vector<2x128xf32> to vector<2x32xf32>
    %53 = arith.mulf %46, %27 : vector<2x32xf32>
    %54 = arith.mulf %45, %51 : vector<2x32xf32>
    %55 = arith.addf %53, %54 : vector<2x32xf32>
    %56 = math.tanh %55 : vector<2x32xf32>
    %57 = arith.mulf %52, %56 : vector<2x32xf32>
    %58 = vector.extract_strided_slice %0 {offsets = [0, 2, 0], sizes = [2, 1, 1], strides = [1, 1, 1]} : vector<2x8x1xf32> to vector<2x1x1xf32>
    %59 = vector.shape_cast %58 : vector<2x1x1xf32> to vector<2x1xf32>
    %60 = vector.broadcast %59 : vector<2x1xf32> to vector<2x128xf32>
    %61 = vector.broadcast %1 : vector<1x128xf32> to vector<2x128xf32>
    %62 = arith.mulf %60, %61 : vector<2x128xf32>
    %63 = vector.broadcast %3 : vector<1x128xf32> to vector<2x128xf32>
    %64 = arith.addf %62, %63 : vector<2x128xf32>
    %65 = arith.truncf %57 : vector<2x32xf32> to vector<2x32xbf16>
    %cst_15 = arith.constant dense<0.000000e+00> : vector<2x128xf32>
    %66 = tpu.matmul %65, %2, %cst_15 {dimension_numbers = #tpu.dot_dimension_numbers<[1], [0], [0], [1], [0, 0, 1, 1], [], []>} : vector<2x32xbf16>, vector<32x128xbf16>, vector<2x128xf32> -> vector<2x128xf32>
    %67 = arith.addf %64, %66 : vector<2x128xf32>
    %68 = arith.negf %67 : vector<2x128xf32>
    %69 = math.exp %68 : vector<2x128xf32>
    %cst_16 = arith.constant 1.000000e+00 : f32
    %70 = vector.broadcast %cst_16 : f32 to vector<2x128xf32>
    %71 = arith.addf %70, %69 : vector<2x128xf32>
    %72 = arith.divf %70, %71 : vector<2x128xf32>
    %73 = vector.extract_strided_slice %72 {offsets = [0, 0], sizes = [2, 32], strides = [1, 1]} : vector<2x128xf32> to vector<2x32xf32>
    %74 = vector.extract_strided_slice %72 {offsets = [0, 32], sizes = [2, 32], strides = [1, 1]} : vector<2x128xf32> to vector<2x32xf32>
    %75 = vector.extract_strided_slice %72 {offsets = [0, 64], sizes = [2, 32], strides = [1, 1]} : vector<2x128xf32> to vector<2x32xf32>
    %cst_17 = arith.constant 2.000000e+00 : f32
    %76 = vector.broadcast %cst_17 : f32 to vector<2x32xf32>
    %77 = arith.mulf %76, %75 : vector<2x32xf32>
    %cst_18 = arith.constant 1.000000e+00 : f32
    %78 = vector.broadcast %cst_18 : f32 to vector<2x32xf32>
    %79 = arith.subf %77, %78 : vector<2x32xf32>
    %80 = vector.extract_strided_slice %72 {offsets = [0, 96], sizes = [2, 32], strides = [1, 1]} : vector<2x128xf32> to vector<2x32xf32>
    %81 = arith.mulf %74, %55 : vector<2x32xf32>
    %82 = arith.mulf %73, %79 : vector<2x32xf32>
    %83 = arith.addf %81, %82 : vector<2x32xf32>
    %84 = math.tanh %83 : vector<2x32xf32>
    %85 = arith.mulf %80, %84 : vector<2x32xf32>
    %86 = vector.extract_strided_slice %0 {offsets = [0, 3, 0], sizes = [2, 1, 1], strides = [1, 1, 1]} : vector<2x8x1xf32> to vector<2x1x1xf32>
    %87 = vector.shape_cast %86 : vector<2x1x1xf32> to vector<2x1xf32>
    %88 = vector.broadcast %87 : vector<2x1xf32> to vector<2x128xf32>
    %89 = vector.broadcast %1 : vector<1x128xf32> to vector<2x128xf32>
    %90 = arith.mulf %88, %89 : vector<2x128xf32>
    %91 = vector.broadcast %3 : vector<1x128xf32> to vector<2x128xf32>
    %92 = arith.addf %90, %91 : vector<2x128xf32>
    %93 = arith.truncf %85 : vector<2x32xf32> to vector<2x32xbf16>
    %cst_19 = arith.constant dense<0.000000e+00> : vector<2x128xf32>
    %94 = tpu.matmul %93, %2, %cst_19 {dimension_numbers = #tpu.dot_dimension_numbers<[1], [0], [0], [1], [0, 0, 1, 1], [], []>} : vector<2x32xbf16>, vector<32x128xbf16>, vector<2x128xf32> -> vector<2x128xf32>
    %95 = arith.addf %92, %94 : vector<2x128xf32>
    %96 = arith.negf %95 : vector<2x128xf32>
    %97 = math.exp %96 : vector<2x128xf32>
    %cst_20 = arith.constant 1.000000e+00 : f32
    %98 = vector.broadcast %cst_20 : f32 to vector<2x128xf32>
    %99 = arith.addf %98, %97 : vector<2x128xf32>
    %100 = arith.divf %98, %99 : vector<2x128xf32>
    %101 = vector.extract_strided_slice %100 {offsets = [0, 0], sizes = [2, 32], strides = [1, 1]} : vector<2x128xf32> to vector<2x32xf32>
    %102 = vector.extract_strided_slice %100 {offsets = [0, 32], sizes = [2, 32], strides = [1, 1]} : vector<2x128xf32> to vector<2x32xf32>
    %103 = vector.extract_strided_slice %100 {offsets = [0, 64], sizes = [2, 32], strides = [1, 1]} : vector<2x128xf32> to vector<2x32xf32>
    %cst_21 = arith.constant 2.000000e+00 : f32
    %104 = vector.broadcast %cst_21 : f32 to vector<2x32xf32>
    %105 = arith.mulf %104, %103 : vector<2x32xf32>
    %cst_22 = arith.constant 1.000000e+00 : f32
    %106 = vector.broadcast %cst_22 : f32 to vector<2x32xf32>
    %107 = arith.subf %105, %106 : vector<2x32xf32>
    %108 = vector.extract_strided_slice %100 {offsets = [0, 96], sizes = [2, 32], strides = [1, 1]} : vector<2x128xf32> to vector<2x32xf32>
    %109 = arith.mulf %102, %83 : vector<2x32xf32>
    %110 = arith.mulf %101, %107 : vector<2x32xf32>
    %111 = arith.addf %109, %110 : vector<2x32xf32>
    %112 = math.tanh %111 : vector<2x32xf32>
    %113 = arith.mulf %108, %112 : vector<2x32xf32>
    %114 = vector.extract_strided_slice %0 {offsets = [0, 4, 0], sizes = [2, 1, 1], strides = [1, 1, 1]} : vector<2x8x1xf32> to vector<2x1x1xf32>
    %115 = vector.shape_cast %114 : vector<2x1x1xf32> to vector<2x1xf32>
    %116 = vector.broadcast %115 : vector<2x1xf32> to vector<2x128xf32>
    %117 = vector.broadcast %1 : vector<1x128xf32> to vector<2x128xf32>
    %118 = arith.mulf %116, %117 : vector<2x128xf32>
    %119 = vector.broadcast %3 : vector<1x128xf32> to vector<2x128xf32>
    %120 = arith.addf %118, %119 : vector<2x128xf32>
    %121 = arith.truncf %113 : vector<2x32xf32> to vector<2x32xbf16>
    %cst_23 = arith.constant dense<0.000000e+00> : vector<2x128xf32>
    %122 = tpu.matmul %121, %2, %cst_23 {dimension_numbers = #tpu.dot_dimension_numbers<[1], [0], [0], [1], [0, 0, 1, 1], [], []>} : vector<2x32xbf16>, vector<32x128xbf16>, vector<2x128xf32> -> vector<2x128xf32>
    %123 = arith.addf %120, %122 : vector<2x128xf32>
    %124 = arith.negf %123 : vector<2x128xf32>
    %125 = math.exp %124 : vector<2x128xf32>
    %cst_24 = arith.constant 1.000000e+00 : f32
    %126 = vector.broadcast %cst_24 : f32 to vector<2x128xf32>
    %127 = arith.addf %126, %125 : vector<2x128xf32>
    %128 = arith.divf %126, %127 : vector<2x128xf32>
    %129 = vector.extract_strided_slice %128 {offsets = [0, 0], sizes = [2, 32], strides = [1, 1]} : vector<2x128xf32> to vector<2x32xf32>
    %130 = vector.extract_strided_slice %128 {offsets = [0, 32], sizes = [2, 32], strides = [1, 1]} : vector<2x128xf32> to vector<2x32xf32>
    %131 = vector.extract_strided_slice %128 {offsets = [0, 64], sizes = [2, 32], strides = [1, 1]} : vector<2x128xf32> to vector<2x32xf32>
    %cst_25 = arith.constant 2.000000e+00 : f32
    %132 = vector.broadcast %cst_25 : f32 to vector<2x32xf32>
    %133 = arith.mulf %132, %131 : vector<2x32xf32>
    %cst_26 = arith.constant 1.000000e+00 : f32
    %134 = vector.broadcast %cst_26 : f32 to vector<2x32xf32>
    %135 = arith.subf %133, %134 : vector<2x32xf32>
    %136 = vector.extract_strided_slice %128 {offsets = [0, 96], sizes = [2, 32], strides = [1, 1]} : vector<2x128xf32> to vector<2x32xf32>
    %137 = arith.mulf %130, %111 : vector<2x32xf32>
    %138 = arith.mulf %129, %135 : vector<2x32xf32>
    %139 = arith.addf %137, %138 : vector<2x32xf32>
    %140 = math.tanh %139 : vector<2x32xf32>
    %141 = arith.mulf %136, %140 : vector<2x32xf32>
    %142 = vector.extract_strided_slice %0 {offsets = [0, 5, 0], sizes = [2, 1, 1], strides = [1, 1, 1]} : vector<2x8x1xf32> to vector<2x1x1xf32>
    %143 = vector.shape_cast %142 : vector<2x1x1xf32> to vector<2x1xf32>
    %144 = vector.broadcast %143 : vector<2x1xf32> to vector<2x128xf32>
    %145 = vector.broadcast %1 : vector<1x128xf32> to vector<2x128xf32>
    %146 = arith.mulf %144, %145 : vector<2x128xf32>
    %147 = vector.broadcast %3 : vector<1x128xf32> to vector<2x128xf32>
    %148 = arith.addf %146, %147 : vector<2x128xf32>
    %149 = arith.truncf %141 : vector<2x32xf32> to vector<2x32xbf16>
    %cst_27 = arith.constant dense<0.000000e+00> : vector<2x128xf32>
    %150 = tpu.matmul %149, %2, %cst_27 {dimension_numbers = #tpu.dot_dimension_numbers<[1], [0], [0], [1], [0, 0, 1, 1], [], []>} : vector<2x32xbf16>, vector<32x128xbf16>, vector<2x128xf32> -> vector<2x128xf32>
    %151 = arith.addf %148, %150 : vector<2x128xf32>
    %152 = arith.negf %151 : vector<2x128xf32>
    %153 = math.exp %152 : vector<2x128xf32>
    %cst_28 = arith.constant 1.000000e+00 : f32
    %154 = vector.broadcast %cst_28 : f32 to vector<2x128xf32>
    %155 = arith.addf %154, %153 : vector<2x128xf32>
    %156 = arith.divf %154, %155 : vector<2x128xf32>
    %157 = vector.extract_strided_slice %156 {offsets = [0, 0], sizes = [2, 32], strides = [1, 1]} : vector<2x128xf32> to vector<2x32xf32>
    %158 = vector.extract_strided_slice %156 {offsets = [0, 32], sizes = [2, 32], strides = [1, 1]} : vector<2x128xf32> to vector<2x32xf32>
    %159 = vector.extract_strided_slice %156 {offsets = [0, 64], sizes = [2, 32], strides = [1, 1]} : vector<2x128xf32> to vector<2x32xf32>
    %cst_29 = arith.constant 2.000000e+00 : f32
    %160 = vector.broadcast %cst_29 : f32 to vector<2x32xf32>
    %161 = arith.mulf %160, %159 : vector<2x32xf32>
    %cst_30 = arith.constant 1.000000e+00 : f32
    %162 = vector.broadcast %cst_30 : f32 to vector<2x32xf32>
    %163 = arith.subf %161, %162 : vector<2x32xf32>
    %164 = vector.extract_strided_slice %156 {offsets = [0, 96], sizes = [2, 32], strides = [1, 1]} : vector<2x128xf32> to vector<2x32xf32>
    %165 = arith.mulf %158, %139 : vector<2x32xf32>
    %166 = arith.mulf %157, %163 : vector<2x32xf32>
    %167 = arith.addf %165, %166 : vector<2x32xf32>
    %168 = math.tanh %167 : vector<2x32xf32>
    %169 = arith.mulf %164, %168 : vector<2x32xf32>
    %170 = vector.extract_strided_slice %0 {offsets = [0, 6, 0], sizes = [2, 1, 1], strides = [1, 1, 1]} : vector<2x8x1xf32> to vector<2x1x1xf32>
    %171 = vector.shape_cast %170 : vector<2x1x1xf32> to vector<2x1xf32>
    %172 = vector.broadcast %171 : vector<2x1xf32> to vector<2x128xf32>
    %173 = vector.broadcast %1 : vector<1x128xf32> to vector<2x128xf32>
    %174 = arith.mulf %172, %173 : vector<2x128xf32>
    %175 = vector.broadcast %3 : vector<1x128xf32> to vector<2x128xf32>
    %176 = arith.addf %174, %175 : vector<2x128xf32>
    %177 = arith.truncf %169 : vector<2x32xf32> to vector<2x32xbf16>
    %cst_31 = arith.constant dense<0.000000e+00> : vector<2x128xf32>
    %178 = tpu.matmul %177, %2, %cst_31 {dimension_numbers = #tpu.dot_dimension_numbers<[1], [0], [0], [1], [0, 0, 1, 1], [], []>} : vector<2x32xbf16>, vector<32x128xbf16>, vector<2x128xf32> -> vector<2x128xf32>
    %179 = arith.addf %176, %178 : vector<2x128xf32>
    %180 = arith.negf %179 : vector<2x128xf32>
    %181 = math.exp %180 : vector<2x128xf32>
    %cst_32 = arith.constant 1.000000e+00 : f32
    %182 = vector.broadcast %cst_32 : f32 to vector<2x128xf32>
    %183 = arith.addf %182, %181 : vector<2x128xf32>
    %184 = arith.divf %182, %183 : vector<2x128xf32>
    %185 = vector.extract_strided_slice %184 {offsets = [0, 0], sizes = [2, 32], strides = [1, 1]} : vector<2x128xf32> to vector<2x32xf32>
    %186 = vector.extract_strided_slice %184 {offsets = [0, 32], sizes = [2, 32], strides = [1, 1]} : vector<2x128xf32> to vector<2x32xf32>
    %187 = vector.extract_strided_slice %184 {offsets = [0, 64], sizes = [2, 32], strides = [1, 1]} : vector<2x128xf32> to vector<2x32xf32>
    %cst_33 = arith.constant 2.000000e+00 : f32
    %188 = vector.broadcast %cst_33 : f32 to vector<2x32xf32>
    %189 = arith.mulf %188, %187 : vector<2x32xf32>
    %cst_34 = arith.constant 1.000000e+00 : f32
    %190 = vector.broadcast %cst_34 : f32 to vector<2x32xf32>
    %191 = arith.subf %189, %190 : vector<2x32xf32>
    %192 = vector.extract_strided_slice %184 {offsets = [0, 96], sizes = [2, 32], strides = [1, 1]} : vector<2x128xf32> to vector<2x32xf32>
    %193 = arith.mulf %186, %167 : vector<2x32xf32>
    %194 = arith.mulf %185, %191 : vector<2x32xf32>
    %195 = arith.addf %193, %194 : vector<2x32xf32>
    %196 = math.tanh %195 : vector<2x32xf32>
    %197 = arith.mulf %192, %196 : vector<2x32xf32>
    %198 = vector.extract_strided_slice %0 {offsets = [0, 7, 0], sizes = [2, 1, 1], strides = [1, 1, 1]} : vector<2x8x1xf32> to vector<2x1x1xf32>
    %199 = vector.shape_cast %198 : vector<2x1x1xf32> to vector<2x1xf32>
    %200 = vector.broadcast %199 : vector<2x1xf32> to vector<2x128xf32>
    %201 = vector.broadcast %1 : vector<1x128xf32> to vector<2x128xf32>
    %202 = arith.mulf %200, %201 : vector<2x128xf32>
    %203 = vector.broadcast %3 : vector<1x128xf32> to vector<2x128xf32>
    %204 = arith.addf %202, %203 : vector<2x128xf32>
    %205 = arith.truncf %197 : vector<2x32xf32> to vector<2x32xbf16>
    %cst_35 = arith.constant dense<0.000000e+00> : vector<2x128xf32>
    %206 = tpu.matmul %205, %2, %cst_35 {dimension_numbers = #tpu.dot_dimension_numbers<[1], [0], [0], [1], [0, 0, 1, 1], [], []>} : vector<2x32xbf16>, vector<32x128xbf16>, vector<2x128xf32> -> vector<2x128xf32>
    %207 = arith.addf %204, %206 : vector<2x128xf32>
    %208 = arith.negf %207 : vector<2x128xf32>
    %209 = math.exp %208 : vector<2x128xf32>
    %cst_36 = arith.constant 1.000000e+00 : f32
    %210 = vector.broadcast %cst_36 : f32 to vector<2x128xf32>
    %211 = arith.addf %210, %209 : vector<2x128xf32>
    %212 = arith.divf %210, %211 : vector<2x128xf32>
    %213 = vector.extract_strided_slice %212 {offsets = [0, 0], sizes = [2, 32], strides = [1, 1]} : vector<2x128xf32> to vector<2x32xf32>
    %214 = vector.extract_strided_slice %212 {offsets = [0, 32], sizes = [2, 32], strides = [1, 1]} : vector<2x128xf32> to vector<2x32xf32>
    %215 = vector.extract_strided_slice %212 {offsets = [0, 64], sizes = [2, 32], strides = [1, 1]} : vector<2x128xf32> to vector<2x32xf32>
    %cst_37 = arith.constant 2.000000e+00 : f32
    %216 = vector.broadcast %cst_37 : f32 to vector<2x32xf32>
    %217 = arith.mulf %216, %215 : vector<2x32xf32>
    %cst_38 = arith.constant 1.000000e+00 : f32
    %218 = vector.broadcast %cst_38 : f32 to vector<2x32xf32>
    %219 = arith.subf %217, %218 : vector<2x32xf32>
    %220 = vector.extract_strided_slice %212 {offsets = [0, 96], sizes = [2, 32], strides = [1, 1]} : vector<2x128xf32> to vector<2x32xf32>
    %221 = arith.mulf %214, %195 : vector<2x32xf32>
    %222 = arith.mulf %213, %219 : vector<2x32xf32>
    %223 = arith.addf %221, %222 : vector<2x32xf32>
    %224 = math.tanh %223 : vector<2x32xf32>
    %225 = arith.mulf %220, %224 : vector<2x32xf32>
    %c0_39 = arith.constant 0 : index
    %c0_40 = arith.constant 0 : index
    %226 = vector.load %arg4[%c0_39, %c0_40] : memref<1x32xf32, #tpu.memory_space<vmem>>, vector<1x32xf32>
    %227 = vector.broadcast %226 : vector<1x32xf32> to vector<2x32xf32>
    %228 = arith.mulf %225, %227 : vector<2x32xf32>
    %cst_41 = arith.constant dense<0.000000e+00> : vector<2xf32>
    %229 = vector.multi_reduction <add>, %228, %cst_41 [1] : vector<2x32xf32> to vector<2xf32>
    %230 = vector.shape_cast %229 : vector<2xf32> to vector<2x1xf32>
    %c0_42 = arith.constant 0 : index
    %c0_43 = arith.constant 0 : index
    %231 = vector.load %arg5[%c0_42, %c0_43] : memref<1x1xf32, #tpu.memory_space<vmem>>, vector<1x1xf32>
    %232 = vector.broadcast %231 : vector<1x1xf32> to vector<2x1xf32>
    %233 = arith.addf %230, %232 : vector<2x1xf32>
    %c0_44 = arith.constant 0 : index
    %c0_45 = arith.constant 0 : index
    %234 = vector.load %arg6[%c0_44, %c0_45] : memref<2x1xf32, #tpu.memory_space<vmem>>, vector<2x1xf32>
    tpu.vector_store %arg6[%c0_44, %c0_45], %233 {strides = array<i32>} : memref<2x1xf32, #tpu.memory_space<vmem>>, vector<2x1xf32>,
    return
  }
}

</mosaic_0001>

<llo_original>
// kernel: lstm_model_forward.1
$region0: #{lstm_model_forward.1}
  #allocation0 [shape = 'u32[]', space=smem, size = 0x4, offset = 0x4, fixed_abs, tag = 'smem constant byte address 0x4 - core index']
  #allocation1 [shape = 'u32[144,128]{1,0:T(1,128)}', space=vmem, size = 0x12000, scoped, tag = 'internal scratch']
  #allocation2 [shape = 'f32[1,1]{1,0:T(1,128)S(1)}', space=vmem, size = 0x200, scoped, tag = 'scoped memory for lstm_model_forward.1']
  %s0 = inlined_call_operand.vmem [shape: f32[2,8,1], index: 0, kind: input, shape index: {}]
  %s1 = inlined_call_operand.vmem [shape: f32[1,128], index: 1, kind: input, shape index: {}]
  %s2 = inlined_call_operand.vmem [shape: bf16[32,128], index: 2, kind: input, shape index: {}]
  %s3 = inlined_call_operand.vmem [shape: f32[1,128], index: 3, kind: input, shape index: {}]
  %s4 = inlined_call_operand.vmem [shape: f32[1,32], index: 4, kind: input, shape index: {}]
  %s5 = inlined_call_operand.<no memory space> [shape: f32[1,1], index: 5, kind: input, shape index: {}]
  %s6 = inlined_call_operand.vmem [shape: f32[2,1], index: 6, kind: output, shape index: {}]
  %s7 = sld [smem:[#allocation0]]
  $region34: #{lstm_model_forward.1} parent=0
    _
  %s9 = ssub.s32 1, %s7
  %s10 = scalar_select 0, %s9, %s7
  %v11 = vstv %s5
  %12 = vst [vmem:[#allocation2] sm:$0x1] %v11
  // Predicated region
  $region2: #{lstm_model_forward.1} parent=0 // pred_check
    _
  $region3: #{lstm_model_forward.1} parent=0 // pred_check_branch
    %14 = sbr.rel (0) target = $region5
  $region4: #{lstm_model_forward.1} parent=0 // pred_region
    _
  $region5: #{lstm_model_forward.1} parent=0 // pred_fallthru
    _
  // Predicated region
  $region6: #{lstm_model_forward.1} parent=0 // pred_check
    _
  $region7: #{lstm_model_forward.1} parent=0 // pred_check_branch
    %16 = sbr.rel (0) target = $region9
  $region8: #{lstm_model_forward.1} parent=0 // pred_region
    _
  $region9: #{lstm_model_forward.1} parent=0 // pred_fallthru
    _
  // Predicated region
  $region10: #{lstm_model_forward.1} parent=0 // pred_check
    _
  $region11: #{lstm_model_forward.1} parent=0 // pred_check_branch
    %18 = sbr.rel (0) target = $region13
  $region12: #{lstm_model_forward.1} parent=0 // pred_region
    _
  $region13: #{lstm_model_forward.1} parent=0 // pred_fallthru
    _
  // Predicated region
  $region14: #{lstm_model_forward.1} parent=0 // pred_check
    _
  $region15: #{lstm_model_forward.1} parent=0 // pred_check_branch
    %20 = sbr.rel (0) target = $region17
  $region16: #{lstm_model_forward.1} parent=0 // pred_region
    _
  $region17: #{lstm_model_forward.1} parent=0 // pred_fallthru
    _
  // Predicated region
  $region18: #{lstm_model_forward.1} parent=0 // pred_check
    _
  $region19: #{lstm_model_forward.1} parent=0 // pred_check_branch
    %22 = sbr.rel (0) target = $region21
  $region20: #{lstm_model_forward.1} parent=0 // pred_region
    _
  $region21: #{lstm_model_forward.1} parent=0 // pred_fallthru
    _
  // Predicated region
  $region22: #{lstm_model_forward.1} parent=0 // pred_check
    _
  $region23: #{lstm_model_forward.1} parent=0 // pred_check_branch
    %24 = sbr.rel (0) target = $region25
  $region24: #{lstm_model_forward.1} parent=0 // pred_region
    _
  $region25: #{lstm_model_forward.1} parent=0 // pred_fallthru
    _
  %v26 = vld [vmem:[%s0] sm:$0xff]
  %v27 = vld [vmem:[%s0 + $0x8] sm:$0xff]
  %v28 = vld [vmem:[%s1] sm:$0x1]
  %v29 = vld [vmem:[%s2] sm:$0xf]
  %v30 = vld [vmem:[%s2 + $0x4] sm:$0xf]
  %v31 = vld [vmem:[%s2 + $0x8] sm:$0xf]
  %v32 = vld [vmem:[%s2 + $0xc] sm:$0xf]
  %v33 = vld [vmem:[%s3] sm:$0x1]
  %35 = vset.pattern.permute.xlu0 0
  %36 = vperm.xlu0 %35, %v26
  %v37 = vpop.permute.xlu0 %36
  %40 = vset.pattern.permute.xlu0 0
  %41 = vperm.xlu0 %40, %v27
  %v42 = vpop.permute.xlu0 %41
  %v45 = vlaneseq
  %v46 = vshrl.u32 %v45, 7
  %v47 = vsub.s32 0, %v46
  %v48 = vrot.slane %v28, %v47
  %v50 = vmul.f32 %v37, %v48
  %v51 = vmul.f32 %v42, %v48
  %v53 = vlaneseq
  %v54 = vshrl.u32 %v53, 7
  %v55 = vsub.s32 0, %v54
  %v56 = vrot.slane %v33, %v55
  %v58 = vadd.f32 %v50, %v56
  %v59 = vadd.f32 %v51, %v56
  %v60 = vxor.u32 %v58, 2147483648
  %v61 = vxor.u32 %v59, 2147483648
  %v62 = vmul.f32 %v60, 1.442695
  %v63 = vpow.pop %v62
  %v64 = vmul.f32 %v61, 1.442695
  %v65 = vpow.pop %v64
  %v66 = vadd.f32 %v63, 1.0
  %v67 = vadd.f32 %v65, 1.0
  %v68 = vrcp.pop %v66
  %v69 = vmul.f32 1.0, %v68
  %v70 = vrcp.pop %v67
  %v71 = vmul.f32 1.0, %v70
  %v72 = vmul.f32 %v69, 2.0
  %v73 = vmul.f32 %v71, 2.0
  %v74 = vsub.f32 %v72, 1.0
  %v75 = vsub.f32 %v73, 1.0
  %v76 = vmul.f32 %v69, 0.0
  %v77 = vmul.f32 %v71, 0.0
  %80 = vrot.lane.b32.xlu0 %v74, 64
  %v81 = vpop.permute.xlu0 %80
  %82 = vrot.lane.b32.xlu0 %v75, 64
  %v83 = vpop.permute.xlu0 %82
  %v86 = vmul.f32 %v69, %v81
  %v87 = vmul.f32 %v71, %v83
  %90 = vrot.lane.b32.xlu0 %v86, 32
  %v91 = vpop.permute.xlu0 %90
  %92 = vrot.lane.b32.xlu0 %v87, 32
  %v93 = vpop.permute.xlu0 %92
  %v96 = vadd.f32 %v76, %v91
  %v97 = vadd.f32 %v77, %v93
  %v98 = vtanh.pop %v96
  %v99 = vtanh.pop %v97
  %102 = vrot.lane.b32.xlu0 %v98, 64
  %v103 = vpop.permute.xlu0 %102
  %104 = vrot.lane.b32.xlu0 %v99, 64
  %v105 = vpop.permute.xlu0 %104
  %v108 = vmul.f32 %v69, %v103
  %v109 = vmul.f32 %v71, %v105
  %v110 = vpack.c.bf16 %v108, %v108
  %v111 = vpack.c.bf16 %v109, %v109
  %v114 = vunpack.c.l.b16 %v110
  %v115 = vunpack.c.l.b16 %v111
  %v116 = vrot.slane %v115, 7
  %vm117 = vcmask 1041409
  %v118 = vsel %vm117, %v116, %v114
  %v119 = vpack.c.b16 %v118, %v118
  %120 = vrot.lane.b32.xlu0 %v119, 32
  %v121 = vpop.permute.xlu0 %120
  %v126 = vunpack.c.l.b16 %v29
  %v127 = vunpack.c.l.b16 %v30
  %v128 = vunpack.c.l.b16 %v31
  %v129 = vunpack.c.l.b16 %v32
  %v130 = vpack.c.b16 %v127, %v126
  %v131 = vpack.c.b16 %v129, %v128
  %vm134 = vcmask 261120
  %v136 = vsel %vm134, %v121, 0
  %138 = vmatprep.subr.bf16.mxu0 0
  %139 = vmatpush1.bf16.msra.mxu0 %v130
  %140 = vmatprep.subr.bf16.mxu0 0
  %141 = vmatpush1.bf16.msra.mxu0 %v131
  %142 = vmatprep.subr.bf16.mxu0 0
  %143 = vmatpush1.bf16.msra.mxu0 0
  %144 = vmatprep.subr.bf16.mxu0 0
  %145 = vmatpush1.bf16.msra.mxu0 0
  %146 = vmatprep.subr.bf16.mxu0 0
  %147 = vmatpush1.bf16.msra.mxu0 0
  %148 = vmatprep.subr.bf16.mxu0 0
  %149 = vmatpush1.bf16.msra.mxu0 0
  %150 = vmatprep.subr.bf16.mxu0 0
  %151 = vmatpush1.bf16.msra.mxu0 0
  %152 = vmatprep.subr.bf16.mxu0 0
  %153 = vmatpush1.bf16.msra.mxu0 0
  %154 = vmatprep.subr.bf16.mxu0 0
  %155 = vmatpush1.bf16.msra.mxu0 0
  %156 = vmatprep.subr.bf16.mxu0 0
  %157 = vmatpush1.bf16.msra.mxu0 0
  %158 = vmatprep.subr.bf16.mxu0 0
  %159 = vmatpush1.bf16.msra.mxu0 0
  %160 = vmatprep.subr.bf16.mxu0 0
  %161 = vmatpush1.bf16.msra.mxu0 0
  %162 = vmatprep.subr.bf16.mxu0 0
  %163 = vmatpush1.bf16.msra.mxu0 0
  %164 = vmatprep.subr.bf16.mxu0 0
  %165 = vmatpush1.bf16.msra.mxu0 0
  %166 = vmatprep.subr.bf16.mxu0 0
  %167 = vmatpush1.bf16.msra.mxu0 0
  %168 = vmatprep.subr.bf16.mxu0 0
  %169 = vmatpush1.bf16.msra.mxu0 0
  %170 = vmatprep.mubr.bf16.mxu0 0
  %171 = vmatmul.mubr.bf16.gmra.mrb[0].mxu0 %v136
  %v172 = vpop.f32.mrb[0].mxu0
  %v173 = vadd.f32 0.0, %v172
  %v174 = vpop.f32.mrb[0].mxu0
  %v175 = vpop.f32.mrb[0].mxu0
  %v176 = vpop.f32.mrb[0].mxu0
  %177 = vdwg.mxu0
  %v179 = vrot.slane %v173, 7
  %v182 = vadd.f32 %v58, %v179
  %v183 = vadd.f32 %v59, %v173
  %v184 = vxor.u32 %v182, 2147483648
  %v185 = vxor.u32 %v183, 2147483648
  %v186 = vmul.f32 %v184, 1.442695
  %v187 = vpow.pop %v186
  %v188 = vmul.f32 %v185, 1.442695
  %v189 = vpow.pop %v188
  %v190 = vadd.f32 %v187, 1.0
  %v191 = vadd.f32 %v189, 1.0
  %v192 = vrcp.pop %v190
  %v193 = vmul.f32 1.0, %v192
  %v194 = vrcp.pop %v191
  %v195 = vmul.f32 1.0, %v194
  %v196 = vmul.f32 %v193, 2.0
  %v197 = vmul.f32 %v195, 2.0
  %v198 = vsub.f32 %v196, 1.0
  %v199 = vsub.f32 %v197, 1.0
  %v202 = vrot.slane %v96, 7
  %v203 = vrot.slane %v97, 7
  %v206 = vmul.f32 %v193, %v202
  %v207 = vmul.f32 %v195, %v203
  %210 = vrot.lane.b32.xlu0 %v198, 64
  %v211 = vpop.permute.xlu0 %210
  %212 = vrot.lane.b32.xlu0 %v199, 64
  %v213 = vpop.permute.xlu0 %212
  %v216 = vmul.f32 %v193, %v211
  %v217 = vmul.f32 %v195, %v213
  %220 = vrot.lane.b32.xlu0 %v216, 32
  %v221 = vpop.permute.xlu0 %220
  %222 = vrot.lane.b32.xlu0 %v217, 32
  %v223 = vpop.permute.xlu0 %222
  %v226 = vadd.f32 %v206, %v221
  %v227 = vadd.f32 %v207, %v223
  %v228 = vtanh.pop %v226
  %v229 = vtanh.pop %v227
  %232 = vrot.lane.b32.xlu0 %v228, 64
  %v233 = vpop.permute.xlu0 %232
  %234 = vrot.lane.b32.xlu0 %v229, 64
  %v235 = vpop.permute.xlu0 %234
  %v238 = vmul.f32 %v193, %v233
  %v239 = vmul.f32 %v195, %v235
  %v240 = vpack.c.bf16 %v238, %v238
  %v241 = vpack.c.bf16 %v239, %v239
  %v244 = vunpack.c.l.b16 %v240
  %v245 = vunpack.c.l.b16 %v241
  %v246 = vrot.slane %v244, 1
  %v247 = vsel %vm117, %v245, %v246
  %v248 = vpack.c.b16 %v247, %v247
  %249 = vrot.lane.b32.xlu0 %v248, 32
  %v250 = vpop.permute.xlu0 %249
  %v252 = vsel %vm134, %v250, 0
  %254 = vmatprep.subr.bf16.mxu0 0
  %255 = vmatpush1.bf16.msra.mxu0 %v130
  %256 = vmatprep.subr.bf16.mxu0 0
  %257 = vmatpush1.bf16.msra.mxu0 %v131
  %258 = vmatprep.subr.bf16.mxu0 0
  %259 = vmatpush1.bf16.msra.mxu0 0
  %260 = vmatprep.subr.bf16.mxu0 0
  %261 = vmatpush1.bf16.msra.mxu0 0
  %262 = vmatprep.subr.bf16.mxu0 0
  %263 = vmatpush1.bf16.msra.mxu0 0
  %264 = vmatprep.subr.bf16.mxu0 0
  %265 = vmatpush1.bf16.msra.mxu0 0
  %266 = vmatprep.subr.bf16.mxu0 0
  %267 = vmatpush1.bf16.msra.mxu0 0
  %268 = vmatprep.subr.bf16.mxu0 0
  %269 = vmatpush1.bf16.msra.mxu0 0
  %270 = vmatprep.subr.bf16.mxu0 0
  %271 = vmatpush1.bf16.msra.mxu0 0
  %272 = vmatprep.subr.bf16.mxu0 0
  %273 = vmatpush1.bf16.msra.mxu0 0
  %274 = vmatprep.subr.bf16.mxu0 0
  %275 = vmatpush1.bf16.msra.mxu0 0
  %276 = vmatprep.subr.bf16.mxu0 0
  %277 = vmatpush1.bf16.msra.mxu0 0
  %278 = vmatprep.subr.bf16.mxu0 0
  %279 = vmatpush1.bf16.msra.mxu0 0
  %280 = vmatprep.subr.bf16.mxu0 0
  %281 = vmatpush1.bf16.msra.mxu0 0
  %282 = vmatprep.subr.bf16.mxu0 0
  %283 = vmatpush1.bf16.msra.mxu0 0
  %284 = vmatprep.subr.bf16.mxu0 0
  %285 = vmatpush1.bf16.msra.mxu0 0
  %286 = vmatprep.mubr.bf16.mxu0 0
  %287 = vmatmul.mubr.bf16.gmra.mrb[0].mxu0 %v252
  %v288 = vpop.f32.mrb[0].mxu0
  %v289 = vadd.f32 0.0, %v288
  %v290 = vpop.f32.mrb[0].mxu0
  %v291 = vpop.f32.mrb[0].mxu0
  %v292 = vpop.f32.mrb[0].mxu0
  %293 = vdwg.mxu0
  %v295 = vrot.slane %v289, 6
  %v296 = vrot.slane %v289, 7
  %v299 = vadd.f32 %v58, %v295
  %v300 = vadd.f32 %v59, %v296
  %v301 = vxor.u32 %v299, 2147483648
  %v302 = vxor.u32 %v300, 2147483648
  %v303 = vmul.f32 %v301, 1.442695
  %v304 = vpow.pop %v303
  %v305 = vmul.f32 %v302, 1.442695
  %v306 = vpow.pop %v305
  %v307 = vadd.f32 %v304, 1.0
  %v308 = vadd.f32 %v306, 1.0
  %v309 = vrcp.pop %v307
  %v310 = vmul.f32 1.0, %v309
  %v311 = vrcp.pop %v308
  %v312 = vmul.f32 1.0, %v311
  %v313 = vmul.f32 %v310, 2.0
  %v314 = vmul.f32 %v312, 2.0
  %v315 = vsub.f32 %v313, 1.0
  %v316 = vsub.f32 %v314, 1.0
  %v319 = vrot.slane %v226, 7
  %v320 = vrot.slane %v227, 7
  %v323 = vmul.f32 %v310, %v319
  %v324 = vmul.f32 %v312, %v320
  %327 = vrot.lane.b32.xlu0 %v315, 64
  %v328 = vpop.permute.xlu0 %327
  %329 = vrot.lane.b32.xlu0 %v316, 64
  %v330 = vpop.permute.xlu0 %329
  %v333 = vmul.f32 %v310, %v328
  %v334 = vmul.f32 %v312, %v330
  %337 = vrot.lane.b32.xlu0 %v333, 32
  %v338 = vpop.permute.xlu0 %337
  %339 = vrot.lane.b32.xlu0 %v334, 32
  %v340 = vpop.permute.xlu0 %339
  %v343 = vadd.f32 %v323, %v338
  %v344 = vadd.f32 %v324, %v340
  %v345 = vtanh.pop %v343
  %v346 = vtanh.pop %v344
  %349 = vrot.lane.b32.xlu0 %v345, 64
  %v350 = vpop.permute.xlu0 %349
  %351 = vrot.lane.b32.xlu0 %v346, 64
  %v352 = vpop.permute.xlu0 %351
  %v355 = vmul.f32 %v310, %v350
  %v356 = vmul.f32 %v312, %v352
  %v357 = vpack.c.bf16 %v355, %v355
  %v358 = vpack.c.bf16 %v356, %v356
  %v361 = vunpack.c.l.b16 %v357
  %v362 = vunpack.c.l.b16 %v358
  %v363 = vrot.slane %v361, 2
  %v364 = vrot.slane %v362, 1
  %v365 = vsel %vm117, %v364, %v363
  %v366 = vpack.c.b16 %v365, %v365
  %367 = vrot.lane.b32.xlu0 %v366, 32
  %v368 = vpop.permute.xlu0 %367
  %v370 = vsel %vm134, %v368, 0
  %372 = vmatprep.subr.bf16.mxu0 0
  %373 = vmatpush1.bf16.msra.mxu0 %v130
  %374 = vmatprep.subr.bf16.mxu0 0
  %375 = vmatpush1.bf16.msra.mxu0 %v131
  %376 = vmatprep.subr.bf16.mxu0 0
  %377 = vmatpush1.bf16.msra.mxu0 0
  %378 = vmatprep.subr.bf16.mxu0 0
  %379 = vmatpush1.bf16.msra.mxu0 0
  %380 = vmatprep.subr.bf16.mxu0 0
  %381 = vmatpush1.bf16.msra.mxu0 0
  %382 = vmatprep.subr.bf16.mxu0 0
  %383 = vmatpush1.bf16.msra.mxu0 0
  %384 = vmatprep.subr.bf16.mxu0 0
  %385 = vmatpush1.bf16.msra.mxu0 0
  %386 = vmatprep.subr.bf16.mxu0 0
  %387 = vmatpush1.bf16.msra.mxu0 0
  %388 = vmatprep.subr.bf16.mxu0 0
  %389 = vmatpush1.bf16.msra.mxu0 0
  %390 = vmatprep.subr.bf16.mxu0 0
  %391 = vmatpush1.bf16.msra.mxu0 0
  %392 = vmatprep.subr.bf16.mxu0 0
  %393 = vmatpush1.bf16.msra.mxu0 0
  %394 = vmatprep.subr.bf16.mxu0 0
  %395 = vmatpush1.bf16.msra.mxu0 0
  %396 = vmatprep.subr.bf16.mxu0 0
  %397 = vmatpush1.bf16.msra.mxu0 0
  %398 = vmatprep.subr.bf16.mxu0 0
  %399 = vmatpush1.bf16.msra.mxu0 0
  %400 = vmatprep.subr.bf16.mxu0 0
  %401 = vmatpush1.bf16.msra.mxu0 0
  %402 = vmatprep.subr.bf16.mxu0 0
  %403 = vmatpush1.bf16.msra.mxu0 0
  %404 = vmatprep.mubr.bf16.mxu0 0
  %405 = vmatmul.mubr.bf16.gmra.mrb[0].mxu0 %v370
  %v406 = vpop.f32.mrb[0].mxu0
  %v407 = vadd.f32 0.0, %v406
  %v408 = vpop.f32.mrb[0].mxu0
  %v409 = vpop.f32.mrb[0].mxu0
  %v410 = vpop.f32.mrb[0].mxu0
  %411 = vdwg.mxu0
  %v413 = vrot.slane %v407, 5
  %v414 = vrot.slane %v407, 6
  %v417 = vadd.f32 %v58, %v413
  %v418 = vadd.f32 %v59, %v414
  %v419 = vxor.u32 %v417, 2147483648
  %v420 = vxor.u32 %v418, 2147483648
  %v421 = vmul.f32 %v419, 1.442695
  %v422 = vpow.pop %v421
  %v423 = vmul.f32 %v420, 1.442695
  %v424 = vpow.pop %v423
  %v425 = vadd.f32 %v422, 1.0
  %v426 = vadd.f32 %v424, 1.0
  %v427 = vrcp.pop %v425
  %v428 = vmul.f32 1.0, %v427
  %v429 = vrcp.pop %v426
  %v430 = vmul.f32 1.0, %v429
  %v431 = vmul.f32 %v428, 2.0
  %v432 = vmul.f32 %v430, 2.0
  %v433 = vsub.f32 %v431, 1.0
  %v434 = vsub.f32 %v432, 1.0
  %v437 = vrot.slane %v343, 7
  %v438 = vrot.slane %v344, 7
  %v441 = vmul.f32 %v428, %v437
  %v442 = vmul.f32 %v430, %v438
  %445 = vrot.lane.b32.xlu0 %v433, 64
  %v446 = vpop.permute.xlu0 %445
  %447 = vrot.lane.b32.xlu0 %v434, 64
  %v448 = vpop.permute.xlu0 %447
  %v451 = vmul.f32 %v428, %v446
  %v452 = vmul.f32 %v430, %v448
  %455 = vrot.lane.b32.xlu0 %v451, 32
  %v456 = vpop.permute.xlu0 %455
  %457 = vrot.lane.b32.xlu0 %v452, 32
  %v458 = vpop.permute.xlu0 %457
  %v461 = vadd.f32 %v441, %v456
  %v462 = vadd.f32 %v442, %v458
  %v463 = vtanh.pop %v461
  %v464 = vtanh.pop %v462
  %467 = vrot.lane.b32.xlu0 %v463, 64
  %v468 = vpop.permute.xlu0 %467
  %469 = vrot.lane.b32.xlu0 %v464, 64
  %v470 = vpop.permute.xlu0 %469
  %v473 = vmul.f32 %v428, %v468
  %v474 = vmul.f32 %v430, %v470
  %v475 = vpack.c.bf16 %v473, %v473
  %v476 = vpack.c.bf16 %v474, %v474
  %v479 = vunpack.c.l.b16 %v475
  %v480 = vunpack.c.l.b16 %v476
  %v481 = vrot.slane %v479, 3
  %v482 = vrot.slane %v480, 2
  %v483 = vsel %vm117, %v482, %v481
  %v484 = vpack.c.b16 %v483, %v483
  %485 = vrot.lane.b32.xlu0 %v484, 32
  %v486 = vpop.permute.xlu0 %485
  %v488 = vsel %vm134, %v486, 0
  %490 = vmatprep.subr.bf16.mxu0 0
  %491 = vmatpush1.bf16.msra.mxu0 %v130
  %492 = vmatprep.subr.bf16.mxu0 0
  %493 = vmatpush1.bf16.msra.mxu0 %v131
  %494 = vmatprep.subr.bf16.mxu0 0
  %495 = vmatpush1.bf16.msra.mxu0 0
  %496 = vmatprep.subr.bf16.mxu0 0
  %497 = vmatpush1.bf16.msra.mxu0 0
  %498 = vmatprep.subr.bf16.mxu0 0
  %499 = vmatpush1.bf16.msra.mxu0 0
  %500 = vmatprep.subr.bf16.mxu0 0
  %501 = vmatpush1.bf16.msra.mxu0 0
  %502 = vmatprep.subr.bf16.mxu0 0
  %503 = vmatpush1.bf16.msra.mxu0 0
  %504 = vmatprep.subr.bf16.mxu0 0
  %505 = vmatpush1.bf16.msra.mxu0 0
  %506 = vmatprep.subr.bf16.mxu0 0
  %507 = vmatpush1.bf16.msra.mxu0 0
  %508 = vmatprep.subr.bf16.mxu0 0
  %509 = vmatpush1.bf16.msra.mxu0 0
  %510 = vmatprep.subr.bf16.mxu0 0
  %511 = vmatpush1.bf16.msra.mxu0 0
  %512 = vmatprep.subr.bf16.mxu0 0
  %513 = vmatpush1.bf16.msra.mxu0 0
  %514 = vmatprep.subr.bf16.mxu0 0
  %515 = vmatpush1.bf16.msra.mxu0 0
  %516 = vmatprep.subr.bf16.mxu0 0
  %517 = vmatpush1.bf16.msra.mxu0 0
  %518 = vmatprep.subr.bf16.mxu0 0
  %519 = vmatpush1.bf16.msra.mxu0 0
  %520 = vmatprep.subr.bf16.mxu0 0
  %521 = vmatpush1.bf16.msra.mxu0 0
  %522 = vmatprep.mubr.bf16.mxu0 0
  %523 = vmatmul.mubr.bf16.gmra.mrb[0].mxu0 %v488
  %v524 = vpop.f32.mrb[0].mxu0
  %v525 = vadd.f32 0.0, %v524
  %v526 = vpop.f32.mrb[0].mxu0
  %v527 = vpop.f32.mrb[0].mxu0
  %v528 = vpop.f32.mrb[0].mxu0
  %529 = vdwg.mxu0
  %v531 = vrot.slane %v525, 4
  %v532 = vrot.slane %v525, 5
  %v535 = vadd.f32 %v58, %v531
  %v536 = vadd.f32 %v59, %v532
  %v537 = vxor.u32 %v535, 2147483648
  %v538 = vxor.u32 %v536, 2147483648
  %v539 = vmul.f32 %v537, 1.442695
  %v540 = vpow.pop %v539
  %v541 = vmul.f32 %v538, 1.442695
  %v542 = vpow.pop %v541
  %v543 = vadd.f32 %v540, 1.0
  %v544 = vadd.f32 %v542, 1.0
  %v545 = vrcp.pop %v543
  %v546 = vmul.f32 1.0, %v545
  %v547 = vrcp.pop %v544
  %v548 = vmul.f32 1.0, %v547
  %v549 = vmul.f32 %v546, 2.0
  %v550 = vmul.f32 %v548, 2.0
  %v551 = vsub.f32 %v549, 1.0
  %v552 = vsub.f32 %v550, 1.0
  %v555 = vrot.slane %v461, 7
  %v556 = vrot.slane %v462, 7
  %v559 = vmul.f32 %v546, %v555
  %v560 = vmul.f32 %v548, %v556
  %563 = vrot.lane.b32.xlu0 %v551, 64
  %v564 = vpop.permute.xlu0 %563
  %565 = vrot.lane.b32.xlu0 %v552, 64
  %v566 = vpop.permute.xlu0 %565
  %v569 = vmul.f32 %v546, %v564
  %v570 = vmul.f32 %v548, %v566
  %573 = vrot.lane.b32.xlu0 %v569, 32
  %v574 = vpop.permute.xlu0 %573
  %575 = vrot.lane.b32.xlu0 %v570, 32
  %v576 = vpop.permute.xlu0 %575
  %v579 = vadd.f32 %v559, %v574
  %v580 = vadd.f32 %v560, %v576
  %v581 = vtanh.pop %v579
  %v582 = vtanh.pop %v580
  %585 = vrot.lane.b32.xlu0 %v581, 64
  %v586 = vpop.permute.xlu0 %585
  %587 = vrot.lane.b32.xlu0 %v582, 64
  %v588 = vpop.permute.xlu0 %587
  %v591 = vmul.f32 %v546, %v586
  %v592 = vmul.f32 %v548, %v588
  %v593 = vpack.c.bf16 %v591, %v591
  %v594 = vpack.c.bf16 %v592, %v592
  %v597 = vunpack.c.l.b16 %v593
  %v598 = vunpack.c.l.b16 %v594
  %v599 = vrot.slane %v597, 4
  %v600 = vrot.slane %v598, 3
  %v601 = vsel %vm117, %v600, %v599
  %v602 = vpack.c.b16 %v601, %v601
  %603 = vrot.lane.b32.xlu0 %v602, 32
  %v604 = vpop.permute.xlu0 %603
  %v606 = vsel %vm134, %v604, 0
  %608 = vmatprep.subr.bf16.mxu0 0
  %609 = vmatpush1.bf16.msra.mxu0 %v130
  %610 = vmatprep.subr.bf16.mxu0 0
  %611 = vmatpush1.bf16.msra.mxu0 %v131
  %612 = vmatprep.subr.bf16.mxu0 0
  %613 = vmatpush1.bf16.msra.mxu0 0
  %614 = vmatprep.subr.bf16.mxu0 0
  %615 = vmatpush1.bf16.msra.mxu0 0
  %616 = vmatprep.subr.bf16.mxu0 0
  %617 = vmatpush1.bf16.msra.mxu0 0
  %618 = vmatprep.subr.bf16.mxu0 0
  %619 = vmatpush1.bf16.msra.mxu0 0
  %620 = vmatprep.subr.bf16.mxu0 0
  %621 = vmatpush1.bf16.msra.mxu0 0
  %622 = vmatprep.subr.bf16.mxu0 0
  %623 = vmatpush1.bf16.msra.mxu0 0
  %624 = vmatprep.subr.bf16.mxu0 0
  %625 = vmatpush1.bf16.msra.mxu0 0
  %626 = vmatprep.subr.bf16.mxu0 0
  %627 = vmatpush1.bf16.msra.mxu0 0
  %628 = vmatprep.subr.bf16.mxu0 0
  %629 = vmatpush1.bf16.msra.mxu0 0
  %630 = vmatprep.subr.bf16.mxu0 0
  %631 = vmatpush1.bf16.msra.mxu0 0
  %632 = vmatprep.subr.bf16.mxu0 0
  %633 = vmatpush1.bf16.msra.mxu0 0
  %634 = vmatprep.subr.bf16.mxu0 0
  %635 = vmatpush1.bf16.msra.mxu0 0
  %636 = vmatprep.subr.bf16.mxu0 0
  %637 = vmatpush1.bf16.msra.mxu0 0
  %638 = vmatprep.subr.bf16.mxu0 0
  %639 = vmatpush1.bf16.msra.mxu0 0
  %640 = vmatprep.mubr.bf16.mxu0 0
  %641 = vmatmul.mubr.bf16.gmra.mrb[0].mxu0 %v606
  %v642 = vpop.f32.mrb[0].mxu0
  %v643 = vadd.f32 0.0, %v642
  %v644 = vpop.f32.mrb[0].mxu0
  %v645 = vpop.f32.mrb[0].mxu0
  %v646 = vpop.f32.mrb[0].mxu0
  %647 = vdwg.mxu0
  %v649 = vrot.slane %v643, 3
  %v650 = vrot.slane %v643, 4
  %v653 = vadd.f32 %v58, %v649
  %v654 = vadd.f32 %v59, %v650
  %v655 = vxor.u32 %v653, 2147483648
  %v656 = vxor.u32 %v654, 2147483648
  %v657 = vmul.f32 %v655, 1.442695
  %v658 = vpow.pop %v657
  %v659 = vmul.f32 %v656, 1.442695
  %v660 = vpow.pop %v659
  %v661 = vadd.f32 %v658, 1.0
  %v662 = vadd.f32 %v660, 1.0
  %v663 = vrcp.pop %v661
  %v664 = vmul.f32 1.0, %v663
  %v665 = vrcp.pop %v662
  %v666 = vmul.f32 1.0, %v665
  %v667 = vmul.f32 %v664, 2.0
  %v668 = vmul.f32 %v666, 2.0
  %v669 = vsub.f32 %v667, 1.0
  %v670 = vsub.f32 %v668, 1.0
  %v673 = vrot.slane %v579, 7
  %v674 = vrot.slane %v580, 7
  %v677 = vmul.f32 %v664, %v673
  %v678 = vmul.f32 %v666, %v674
  %681 = vrot.lane.b32.xlu0 %v669, 64
  %v682 = vpop.permute.xlu0 %681
  %683 = vrot.lane.b32.xlu0 %v670, 64
  %v684 = vpop.permute.xlu0 %683
  %v687 = vmul.f32 %v664, %v682
  %v688 = vmul.f32 %v666, %v684
  %691 = vrot.lane.b32.xlu0 %v687, 32
  %v692 = vpop.permute.xlu0 %691
  %693 = vrot.lane.b32.xlu0 %v688, 32
  %v694 = vpop.permute.xlu0 %693
  %v697 = vadd.f32 %v677, %v692
  %v698 = vadd.f32 %v678, %v694
  %v699 = vtanh.pop %v697
  %v700 = vtanh.pop %v698
  %703 = vrot.lane.b32.xlu0 %v699, 64
  %v704 = vpop.permute.xlu0 %703
  %705 = vrot.lane.b32.xlu0 %v700, 64
  %v706 = vpop.permute.xlu0 %705
  %v709 = vmul.f32 %v664, %v704
  %v710 = vmul.f32 %v666, %v706
  %v711 = vpack.c.bf16 %v709, %v709
  %v712 = vpack.c.bf16 %v710, %v710
  %v715 = vunpack.c.l.b16 %v711
  %v716 = vunpack.c.l.b16 %v712
  %v717 = vrot.slane %v715, 5
  %v718 = vrot.slane %v716, 4
  %v719 = vsel %vm117, %v718, %v717
  %v720 = vpack.c.b16 %v719, %v719
  %721 = vrot.lane.b32.xlu0 %v720, 32
  %v722 = vpop.permute.xlu0 %721
  %v724 = vsel %vm134, %v722, 0
  %726 = vmatprep.subr.bf16.mxu0 0
  %727 = vmatpush1.bf16.msra.mxu0 %v130
  %728 = vmatprep.subr.bf16.mxu0 0
  %729 = vmatpush1.bf16.msra.mxu0 %v131
  %730 = vmatprep.subr.bf16.mxu0 0
  %731 = vmatpush1.bf16.msra.mxu0 0
  %732 = vmatprep.subr.bf16.mxu0 0
  %733 = vmatpush1.bf16.msra.mxu0 0
  %734 = vmatprep.subr.bf16.mxu0 0
  %735 = vmatpush1.bf16.msra.mxu0 0
  %736 = vmatprep.subr.bf16.mxu0 0
  %737 = vmatpush1.bf16.msra.mxu0 0
  %738 = vmatprep.subr.bf16.mxu0 0
  %739 = vmatpush1.bf16.msra.mxu0 0
  %740 = vmatprep.subr.bf16.mxu0 0
  %741 = vmatpush1.bf16.msra.mxu0 0
  %742 = vmatprep.subr.bf16.mxu0 0
  %743 = vmatpush1.bf16.msra.mxu0 0
  %744 = vmatprep.subr.bf16.mxu0 0
  %745 = vmatpush1.bf16.msra.mxu0 0
  %746 = vmatprep.subr.bf16.mxu0 0
  %747 = vmatpush1.bf16.msra.mxu0 0
  %748 = vmatprep.subr.bf16.mxu0 0
  %749 = vmatpush1.bf16.msra.mxu0 0
  %750 = vmatprep.subr.bf16.mxu0 0
  %751 = vmatpush1.bf16.msra.mxu0 0
  %752 = vmatprep.subr.bf16.mxu0 0
  %753 = vmatpush1.bf16.msra.mxu0 0
  %754 = vmatprep.subr.bf16.mxu0 0
  %755 = vmatpush1.bf16.msra.mxu0 0
  %756 = vmatprep.subr.bf16.mxu0 0
  %757 = vmatpush1.bf16.msra.mxu0 0
  %758 = vmatprep.mubr.bf16.mxu0 0
  %759 = vmatmul.mubr.bf16.gmra.mrb[0].mxu0 %v724
  %v760 = vpop.f32.mrb[0].mxu0
  %v761 = vadd.f32 0.0, %v760
  %v762 = vpop.f32.mrb[0].mxu0
  %v763 = vpop.f32.mrb[0].mxu0
  %v764 = vpop.f32.mrb[0].mxu0
  %765 = vdwg.mxu0
  %v767 = vrot.slane %v761, 2
  %v768 = vrot.slane %v761, 3
  %v771 = vadd.f32 %v58, %v767
  %v772 = vadd.f32 %v59, %v768
  %v773 = vxor.u32 %v771, 2147483648
  %v774 = vxor.u32 %v772, 2147483648
  %v775 = vmul.f32 %v773, 1.442695
  %v776 = vpow.pop %v775
  %v777 = vmul.f32 %v774, 1.442695
  %v778 = vpow.pop %v777
  %v779 = vadd.f32 %v776, 1.0
  %v780 = vadd.f32 %v778, 1.0
  %v781 = vrcp.pop %v779
  %v782 = vmul.f32 1.0, %v781
  %v783 = vrcp.pop %v780
  %v784 = vmul.f32 1.0, %v783
  %v785 = vmul.f32 %v782, 2.0
  %v786 = vmul.f32 %v784, 2.0
  %v787 = vsub.f32 %v785, 1.0
  %v788 = vsub.f32 %v786, 1.0
  %v791 = vrot.slane %v697, 7
  %v792 = vrot.slane %v698, 7
  %v795 = vmul.f32 %v782, %v791
  %v796 = vmul.f32 %v784, %v792
  %799 = vrot.lane.b32.xlu0 %v787, 64
  %v800 = vpop.permute.xlu0 %799
  %801 = vrot.lane.b32.xlu0 %v788, 64
  %v802 = vpop.permute.xlu0 %801
  %v805 = vmul.f32 %v782, %v800
  %v806 = vmul.f32 %v784, %v802
  %809 = vrot.lane.b32.xlu0 %v805, 32
  %v810 = vpop.permute.xlu0 %809
  %811 = vrot.lane.b32.xlu0 %v806, 32
  %v812 = vpop.permute.xlu0 %811
  %v815 = vadd.f32 %v795, %v810
  %v816 = vadd.f32 %v796, %v812
  %v817 = vtanh.pop %v815
  %v818 = vtanh.pop %v816
  %821 = vrot.lane.b32.xlu0 %v817, 64
  %v822 = vpop.permute.xlu0 %821
  %823 = vrot.lane.b32.xlu0 %v818, 64
  %v824 = vpop.permute.xlu0 %823
  %v827 = vmul.f32 %v782, %v822
  %v828 = vmul.f32 %v784, %v824
  %v829 = vpack.c.bf16 %v827, %v827
  %v830 = vpack.c.bf16 %v828, %v828
  %v833 = vunpack.c.l.b16 %v829
  %v834 = vunpack.c.l.b16 %v830
  %v835 = vrot.slane %v833, 6
  %v836 = vrot.slane %v834, 5
  %v837 = vsel %vm117, %v836, %v835
  %v838 = vpack.c.b16 %v837, %v837
  %839 = vrot.lane.b32.xlu0 %v838, 32
  %v840 = vpop.permute.xlu0 %839
  %v842 = vsel %vm134, %v840, 0
  %844 = vmatprep.subr.bf16.mxu0 0
  %845 = vmatpush1.bf16.msra.mxu0 %v130
  %846 = vmatprep.subr.bf16.mxu0 0
  %847 = vmatpush1.bf16.msra.mxu0 %v131
  %848 = vmatprep.subr.bf16.mxu0 0
  %849 = vmatpush1.bf16.msra.mxu0 0
  %850 = vmatprep.subr.bf16.mxu0 0
  %851 = vmatpush1.bf16.msra.mxu0 0
  %852 = vmatprep.subr.bf16.mxu0 0
  %853 = vmatpush1.bf16.msra.mxu0 0
  %854 = vmatprep.subr.bf16.mxu0 0
  %855 = vmatpush1.bf16.msra.mxu0 0
  %856 = vmatprep.subr.bf16.mxu0 0
  %857 = vmatpush1.bf16.msra.mxu0 0
  %858 = vmatprep.subr.bf16.mxu0 0
  %859 = vmatpush1.bf16.msra.mxu0 0
  %860 = vmatprep.subr.bf16.mxu0 0
  %861 = vmatpush1.bf16.msra.mxu0 0
  %862 = vmatprep.subr.bf16.mxu0 0
  %863 = vmatpush1.bf16.msra.mxu0 0
  %864 = vmatprep.subr.bf16.mxu0 0
  %865 = vmatpush1.bf16.msra.mxu0 0
  %866 = vmatprep.subr.bf16.mxu0 0
  %867 = vmatpush1.bf16.msra.mxu0 0
  %868 = vmatprep.subr.bf16.mxu0 0
  %869 = vmatpush1.bf16.msra.mxu0 0
  %870 = vmatprep.subr.bf16.mxu0 0
  %871 = vmatpush1.bf16.msra.mxu0 0
  %872 = vmatprep.subr.bf16.mxu0 0
  %873 = vmatpush1.bf16.msra.mxu0 0
  %874 = vmatprep.subr.bf16.mxu0 0
  %875 = vmatpush1.bf16.msra.mxu0 0
  %876 = vmatprep.mubr.bf16.mxu0 0
  %877 = vmatmul.mubr.bf16.gmra.mrb[0].mxu0 %v842
  %v878 = vpop.f32.mrb[0].mxu0
  %v879 = vadd.f32 0.0, %v878
  %v880 = vpop.f32.mrb[0].mxu0
  %v881 = vpop.f32.mrb[0].mxu0
  %v882 = vpop.f32.mrb[0].mxu0
  %883 = vdwg.mxu0
  %v885 = vrot.slane %v879, 1
  %v886 = vrot.slane %v879, 2
  %v889 = vadd.f32 %v58, %v885
  %v890 = vadd.f32 %v59, %v886
  %v891 = vxor.u32 %v889, 2147483648
  %v892 = vxor.u32 %v890, 2147483648
  %v893 = vmul.f32 %v891, 1.442695
  %v894 = vpow.pop %v893
  %v895 = vmul.f32 %v892, 1.442695
  %v896 = vpow.pop %v895
  %v897 = vadd.f32 %v894, 1.0
  %v898 = vadd.f32 %v896, 1.0
  %v899 = vrcp.pop %v897
  %v900 = vmul.f32 1.0, %v899
  %v901 = vrcp.pop %v898
  %v902 = vmul.f32 1.0, %v901
  %v903 = vmul.f32 %v900, 2.0
  %v904 = vmul.f32 %v902, 2.0
  %v905 = vsub.f32 %v903, 1.0
  %v906 = vsub.f32 %v904, 1.0
  %v909 = vrot.slane %v815, 7
  %v910 = vrot.slane %v816, 7
  %v913 = vmul.f32 %v900, %v909
  %v914 = vmul.f32 %v902, %v910
  %917 = vrot.lane.b32.xlu0 %v905, 64
  %v918 = vpop.permute.xlu0 %917
  %919 = vrot.lane.b32.xlu0 %v906, 64
  %v920 = vpop.permute.xlu0 %919
  %v923 = vmul.f32 %v900, %v918
  %v924 = vmul.f32 %v902, %v920
  %927 = vrot.lane.b32.xlu0 %v923, 32
  %v928 = vpop.permute.xlu0 %927
  %929 = vrot.lane.b32.xlu0 %v924, 32
  %v930 = vpop.permute.xlu0 %929
  %v933 = vadd.f32 %v913, %v928
  %v934 = vadd.f32 %v914, %v930
  %v935 = vtanh.pop %v933
  %v936 = vtanh.pop %v934
  %939 = vrot.lane.b32.xlu0 %v935, 64
  %v940 = vpop.permute.xlu0 %939
  %941 = vrot.lane.b32.xlu0 %v936, 64
  %v942 = vpop.permute.xlu0 %941
  %v945 = vmul.f32 %v900, %v940
  %v946 = vmul.f32 %v902, %v942
  %v947 = vld [vmem:[%s4] sm:$0x1]
  %v949 = vlaneseq
  %v950 = vshrl.u32 %v949, 7
  %v951 = vsub.s32 0, %v950
  %v952 = vrot.slane %v947, %v951
  %953 = vrot.lane.b32.xlu0 %v952, 96
  %v954 = vpop.permute.xlu0 %953
  %v956 = vmul.f32 %v945, %v954
  %v957 = vmul.f32 %v946, %v954
  %v960 = vrot.slane %v957, 7
  %961 = vrot.lane.b32.xlu0 %v956, 32
  %v962 = vpop.permute.xlu0 %961
  %963 = vrot.lane.b32.xlu0 %v960, 32
  %v964 = vpop.permute.xlu0 %963
  %vm967 = vcmask 261127
  %v968 = vsel %vm967, %v962, 0.0
  %969 = vadd.xlane.f32.xlu0 %v968
  %v970 = vpop.xlane.xlu0 %969
  %vm971 = vcmask 253952
  %v972 = vsel %vm971, %v964, 0.0
  %973 = vadd.xlane.f32.xlu0 %v972
  %v974 = vpop.xlane.xlu0 %973
  %v975 = vld [vmem:[#allocation2] sm:$0x1]
  %v977 = vlaneseq
  %v978 = vshrl.u32 %v977, 7
  %v979 = vsub.s32 0, %v978
  %v980 = vrot.slane %v975, %v979
  %v982 = vadd.f32 %v970, %v980
  %v983 = vadd.f32 %v974, %v980
  %vm984 = vcmask 7175
  %985 = vst.msk [vmem:[%s6 - $0x7] sm:$0x80] %vm984, %v982
  %vm986 = vcmask 0
  %987 = vst.msk [vmem:[%s6 + $0x1] sm:$0x1] %vm986, %v983
  // Predicated region
  $region26: #{lstm_model_forward.1} parent=0 // pred_check
    _
  $region27: #{lstm_model_forward.1} parent=0 // pred_check_branch
    %989 = sbr.rel (0) target = $region29
  $region28: #{lstm_model_forward.1} parent=0 // pred_region
    _
  $region29: #{lstm_model_forward.1} parent=0 // pred_fallthru
    _
  // Predicated region
  $region30: #{lstm_model_forward.1} parent=0 // pred_check
    _
  $region31: #{lstm_model_forward.1} parent=0 // pred_check_branch
    %991 = sbr.rel (0) target = $region33
  $region32: #{lstm_model_forward.1} parent=0 // pred_region
    _
  $region33: #{lstm_model_forward.1} parent=0 // pred_fallthru
    _

</llo_original>
